<compile_context>
chip_gen: v7x
topology: tpu7x:2x2x1
jax: 0.10.0
libtpu: 0.0.40
codegen_flags: <defaults>
</compile_context>

<pallas_src>
import math

import jax
import jax.numpy as jnp
from jax.experimental import pallas as pl
from jax.experimental.pallas import tpu as pltpu


def _round_up(x, m):
    return ((x + m - 1) // m) * m


def _vmem_limit_bytes():
    """Per-generation VMEM limit: ~75% of physical, capped at 100 MiB."""
    try:
        cap = int(pltpu.get_tpu_info().vmem_capacity_bytes)
    except Exception:
        cap = 64 * 1024 * 1024           # v7x-safe fallback
    cap = max(cap, 64 * 1024 * 1024)
    return min(int(cap * 0.75), 100 * 1024 * 1024)


# --------------------------------------------------------------------------
# Kernels.  grid = (i over M, j over N, k over K); K is the reduction axis.
# X tile is cast to bf16 right before the dot; accumulation is f32 on the MXU.
# --------------------------------------------------------------------------
def _mlp_kernel_f32out(x_ref, w_ref, b_ref, o_ref):
    # f32 output: accumulate directly into the resident output block.
    k = pl.program_id(2)

    @pl.when(k == 0)
    def _():
        o_ref[...] = jnp.zeros_like(o_ref)

    o_ref[...] += jnp.dot(x_ref[...].astype(jnp.bfloat16), w_ref[...],
                          preferred_element_type=jnp.float32)

    @pl.when(k == pl.num_programs(2) - 1)
    def _():
        y = o_ref[...] + b_ref[...]          # (tm, tn) + (1, tn), f32
        o_ref[...] = jnp.maximum(y, 0.1 * y)  # LeakyReLU(0.1)


def _mlp_kernel_scratch(x_ref, w_ref, b_ref, o_ref, acc_ref):
    # Non-f32 output: f32 VMEM accumulator scratch, cast at the final store.
    k = pl.program_id(2)

    @pl.when(k == 0)
    def _():
        acc_ref[...] = jnp.zeros_like(acc_ref)

    acc_ref[...] += jnp.dot(x_ref[...].astype(jnp.bfloat16), w_ref[...],
                            preferred_element_type=jnp.float32)

    @pl.when(k == pl.num_programs(2) - 1)
    def _():
        y = acc_ref[...] + b_ref[...]
        o_ref[...] = jnp.maximum(y, 0.1 * y).astype(o_ref.dtype)


# --------------------------------------------------------------------------
# One-time parameter preparation (hoisted out of the per-call path).
# --------------------------------------------------------------------------
def prepare_mlp_params(weight, bias, *, tn_max=2048, tk_max=2048):
    """weight: (n_hidden, n_in) [PyTorch layout]; bias: (n_hidden,)."""
    n_hidden, n_in = weight.shape

    tk = min(tk_max, _round_up(n_in, 128))
    tn = min(tn_max, _round_up(n_hidden, 128))
    # Keep the double-buffered bf16 W tile under ~16 MiB so it coexists with
    # large X / output tiles inside the per-generation VMEM budget.
    w_tile_budget = 16 * 1024 * 1024
    while 2 * tn * tk * 2 > w_tile_budget:
        if tk > 512:
            tk = max(512, _round_up(tk // 2, 128))
        elif tn > 512:
            tn = max(512, _round_up(tn // 2, 128))
        else:
            break

    kp = _round_up(n_in, tk)
    np_ = _round_up(n_hidden, tn)

    # One-time transpose to (K, N), bf16 cast, pad to the tile grid.
    w_kn = jnp.asarray(weight).T.astype(jnp.bfloat16)
    if (kp, np_) != (n_in, n_hidden):
        w_kn = jnp.pad(w_kn, ((0, kp - n_in), (0, np_ - n_hidden)))

    b2d = jnp.asarray(bias).astype(jnp.float32).reshape(1, n_hidden)
    if np_ != n_hidden:
        b2d = jnp.pad(b2d, ((0, 0), (0, np_ - n_hidden)))

    return dict(w=w_kn, b=b2d, n_in=n_in, n_hidden=n_hidden,
                tk=tk, tn=tn, kp=kp, np_=np_)


def _choose_tm(m, tn, tk, x_bytes, out_bytes, use_acc, budget_bytes):
    if m >= 512:
        blocks256 = _round_up(m, 256) // 256
        # 256-aligned for the 2x256x256 MXU; cap so there are >=2 M-tiles
        # (both v7x TensorCores get work on a "parallel" axis).
        tm = min(1024, 256 * max(1, blocks256 // 2))
    else:
        tm = _round_up(max(m, 8), 8)

    def fp(t):
        f = 2 * t * tk * x_bytes + 2 * t * tn * out_bytes   # double-buffered
        if use_acc:
            f += t * tn * 4
        return f

    while fp(tm) > budget_bytes and tm > 256:
        tm = max(256, _round_up(tm // 2, 256))
    while fp(tm) > budget_bytes and tm > 8:
        tm = max(8, _round_up(tm // 2, 8))
    return tm


# --------------------------------------------------------------------------
# Forward pass.
# --------------------------------------------------------------------------
def mlp_forward(x, params):
    """x: (..., n_in); params from prepare_mlp_params()."""
    n_in, n_hidden = params["n_in"], params["n_hidden"]
    tk, tn, kp, np_ = params["tk"], params["tn"], params["kp"], params["np_"]
    assert x.shape[-1] == n_in

    lead = x.shape[:-1]
    m = math.prod(lead) if lead else 1
    out_dtype = x.dtype
    out_bytes = jnp.dtype(out_dtype).itemsize

    n_tiles_n = np_ // tn
    n_tiles_k = kp // tk

    # Pre-cast X to bf16 only when it would be re-streamed across >=3 N tiles;
    # otherwise keep the original dtype and cast per tile inside the kernel
    # (avoids an extra full HBM read+write pass over X).
    x_rereads = n_tiles_n if n_tiles_k > 1 else 1
    precast = (x_rereads >= 3) and (x.dtype == jnp.float32)
    x2d = x.reshape(m, n_in)
    if precast:
        x2d = x2d.astype(jnp.bfloat16)
    x_bytes = jnp.dtype(x2d.dtype).itemsize

    use_acc = out_dtype != jnp.float32
    vmem_limit = _vmem_limit_bytes()
    tile_budget = int(vmem_limit * 0.85) - 2 * tn * tk * 2 - 2 * tn * 4
    tm = _choose_tm(m, tn, tk, x_bytes, out_bytes, use_acc, tile_budget)

    mp = _round_up(m, tm)
    if (mp, kp) != (m, n_in):
        x2d = jnp.pad(x2d, ((0, mp - m), (0, kp - n_in)))

    grid = (mp // tm, np_ // tn, kp // tk)      # (i, j, k) — K innermost
    n_tiles_m = mp // tm

    kernel = _mlp_kernel_scratch if use_acc else _mlp_kernel_f32out
    scratch = [pltpu.VMEM((tm, tn), jnp.float32)] if use_acc else []

    w_rereads = 1 if (n_tiles_n == 1 and n_tiles_k == 1) else n_tiles_m
    cost = pl.CostEstimate(
        flops=2 * mp * np_ * kp,
        transcendentals=0,
        bytes_accessed=(mp * kp * x_bytes * x_rereads
                        + kp * np_ * 2 * w_rereads
                        + np_ * 4
                        + mp * np_ * out_bytes),
    )

    out_p = pl.pallas_call(
        kernel,
        out_shape=jax.ShapeDtypeStruct((mp, np_), out_dtype),
        grid_spec=pltpu.PrefetchScalarGridSpec(
            num_scalar_prefetch=0,
            grid=grid,
            in_specs=[
                pl.BlockSpec((tm, tk), lambda i, j, k: (i, k)),   # X
                pl.BlockSpec((tk, tn), lambda i, j, k: (k, j)),   # W (K, N)
                pl.BlockSpec((1, tn), lambda i, j, k: (0, j)),    # bias
            ],
            out_specs=pl.BlockSpec((tm, tn), lambda i, j, k: (i, j)),
            scratch_shapes=scratch,
        ),
        compiler_params=pltpu.CompilerParams(
            dimension_semantics=("parallel", "parallel", "arbitrary"),
            vmem_limit_bytes=vmem_limit,
        ),
        cost_estimate=cost,
    )(x2d, params["w"], params["b"])

    out2d = out_p[:m, :n_hidden]
    return out2d.reshape(*lead, n_hidden)


def make_orthogonal(key, n_hidden, n_in, dtype=jnp.float32):
    """Deterministic orthogonal init (mirrors nn.init.orthogonal_)."""
    a = jax.random.normal(key, (max(n_hidden, n_in), min(n_hidden, n_in)),
                          dtype=jnp.float32)
    q, r = jnp.linalg.qr(a)
    d = jnp.sign(jnp.diagonal(r))
    q = q * d[None, :]
    if n_hidden < n_in:
        q = q.T
    return q[:n_hidden, :n_in].astype(dtype)


if __name__ == "__main__":
    key = jax.random.PRNGKey(0)
    k_x, k_w = jax.random.split(key)

    batch, seq, n_in, n_hidden = 2, 8, 32, 32
    x = jax.random.normal(k_x, (batch, seq, n_in), dtype=jnp.float32)

    weight = make_orthogonal(k_w, n_hidden, n_in)        # (n_hidden, n_in)
    bias = jnp.zeros((n_hidden,), dtype=jnp.float32)     # nn.init.zeros_

    params = prepare_mlp_params(weight, bias)            # one-time prep
    out = mlp_forward(x, params)
    out = jax.block_until_ready(out)
    assert out.shape == (batch, seq, n_hidden)

    # Reference matching the kernel's bf16-input / f32-accumulate numerics.
    ref = jnp.einsum("bsk,nk->bsn",
                     x.astype(jnp.bfloat16), weight.astype(jnp.bfloat16),
                     preferred_element_type=jnp.float32) + bias
    ref = jnp.maximum(ref, 0.1 * ref).astype(out.dtype)
    assert jnp.allclose(out, ref, atol=1e-2, rtol=1e-2)

    print("KERNEL_OK")
</pallas_src>

<mosaic_0001>
module attributes {stable_mosaic.version = 11 : i64} {
  func.func @_mlp_kernel_f32out(%arg0: i32, %arg1: i32, %arg2: i32, %arg3: memref<16x128xf32, #tpu.memory_space<vmem>>, %arg4: memref<128x128xbf16, #tpu.memory_space<vmem>>, %arg5: memref<1x128xf32, #tpu.memory_space<vmem>>, %arg6: memref<16x128xf32, #tpu.memory_space<vmem>>) attributes {dimension_semantics = [#tpu.dimension_semantics<parallel>, #tpu.dimension_semantics<parallel>, #tpu.dimension_semantics<arbitrary>], iteration_bounds = array<i64: 1, 1, 1>, scalar_prefetch = 0 : i64, scratch_operands = 0 : i64, tpu.core_type = #tpu.core_type<tc>, window_params = [{transform_indices = @transform_0, window_bounds = array<i64: 16, 128>}, {transform_indices = @transform_1, window_bounds = array<i64: 128, 128>}, {transform_indices = @transform_2, window_bounds = array<i64: 1, 128>}, {transform_indices = @transform_3, window_bounds = array<i64: 16, 128>}]} {
    %c0_i32 = arith.constant 0 : i32
    %0 = arith.cmpi eq, %arg2, %c0_i32 : i32
    %1 = arith.extui %0 : i1 to i32
    %c0_i32_0 = arith.constant 0 : i32
    %2 = arith.cmpi ne, %1, %c0_i32_0 : i32
    scf.if %2 {
      %cst_10 = arith.constant 0.000000e+00 : f32
      %13 = vector.broadcast %cst_10 : f32 to vector<16x128xf32>
      %c0_11 = arith.constant 0 : index
      %c0_12 = arith.constant 0 : index
      %14 = vector.load %arg6[%c0_11, %c0_12] : memref<16x128xf32, #tpu.memory_space<vmem>>, vector<16x128xf32>
      tpu.vector_store %arg6[%c0_11, %c0_12], %13 {strides = array<i32>} : memref<16x128xf32, #tpu.memory_space<vmem>>, vector<16x128xf32>,
    } else {
    }
    %c0 = arith.constant 0 : index
    %c0_1 = arith.constant 0 : index
    %3 = vector.load %arg6[%c0, %c0_1] : memref<16x128xf32, #tpu.memory_space<vmem>>, vector<16x128xf32>
    %c0_2 = arith.constant 0 : index
    %c0_3 = arith.constant 0 : index
    %4 = vector.load %arg3[%c0_2, %c0_3] : memref<16x128xf32, #tpu.memory_space<vmem>>, vector<16x128xf32>
    %5 = arith.truncf %4 : vector<16x128xf32> to vector<16x128xbf16>
    %c0_4 = arith.constant 0 : index
    %c0_5 = arith.constant 0 : index
    %6 = vector.load %arg4[%c0_4, %c0_5] : memref<128x128xbf16, #tpu.memory_space<vmem>>, vector<128x128xbf16>
    %cst = arith.constant dense<0.000000e+00> : vector<16x128xf32>
    %7 = tpu.matmul %5, %6, %cst {dimension_numbers = #tpu.dot_dimension_numbers<[1], [0], [0], [1], [0, 0, 1, 1], [], []>} : vector<16x128xbf16>, vector<128x128xbf16>, vector<16x128xf32> -> vector<16x128xf32>
    %8 = arith.addf %3, %7 : vector<16x128xf32>
    %c0_6 = arith.constant 0 : index
    %c0_7 = arith.constant 0 : index
    %9 = vector.load %arg6[%c0_6, %c0_7] : memref<16x128xf32, #tpu.memory_space<vmem>>, vector<16x128xf32>
    tpu.vector_store %arg6[%c0_6, %c0_7], %8 {strides = array<i32>} : memref<16x128xf32, #tpu.memory_space<vmem>>, vector<16x128xf32>,
    %c0_i32_8 = arith.constant 0 : i32
    %10 = arith.cmpi eq, %arg2, %c0_i32_8 : i32
    %11 = arith.extui %10 : i1 to i32
    %c0_i32_9 = arith.constant 0 : i32
    %12 = arith.cmpi ne, %11, %c0_i32_9 : i32
    scf.if %12 {
      %c0_10 = arith.constant 0 : index
      %c0_11 = arith.constant 0 : index
      %13 = vector.load %arg6[%c0_10, %c0_11] : memref<16x128xf32, #tpu.memory_space<vmem>>, vector<16x128xf32>
      %c0_12 = arith.constant 0 : index
      %c0_13 = arith.constant 0 : index
      %14 = vector.load %arg5[%c0_12, %c0_13] : memref<1x128xf32, #tpu.memory_space<vmem>>, vector<1x128xf32>
      %15 = vector.broadcast %14 : vector<1x128xf32> to vector<16x128xf32>
      %16 = arith.addf %13, %15 : vector<16x128xf32>
      %cst_14 = arith.constant 1.000000e-01 : f32
      %17 = vector.broadcast %cst_14 : f32 to vector<16x128xf32>
      %18 = arith.mulf %17, %16 : vector<16x128xf32>
      %19 = arith.maximumf %16, %18 : vector<16x128xf32>
      %c0_15 = arith.constant 0 : index
      %c0_16 = arith.constant 0 : index
      %20 = vector.load %arg6[%c0_15, %c0_16] : memref<16x128xf32, #tpu.memory_space<vmem>>, vector<16x128xf32>
      tpu.vector_store %arg6[%c0_15, %c0_16], %19 {strides = array<i32>} : memref<16x128xf32, #tpu.memory_space<vmem>>, vector<16x128xf32>,
    } else {
    }
    return
  }
  func.func @transform_0(%arg0: i32, %arg1: i32, %arg2: i32) -> (i32, i32) {
    %c0_i32 = arith.constant 0 : i32
    return %arg0, %arg2 : i32, i32
  }
  func.func @transform_1(%arg0: i32, %arg1: i32, %arg2: i32) -> (i32, i32) {
    %c0_i32 = arith.constant 0 : i32
    return %arg2, %arg1 : i32, i32
  }
  func.func @transform_2(%arg0: i32, %arg1: i32, %arg2: i32) -> (i32, i32) {
    %c0_i32 = arith.constant 0 : i32
    %c0_i32_0 = arith.constant 0 : i32
    return %c0_i32, %arg1 : i32, i32
  }
  func.func @transform_3(%arg0: i32, %arg1: i32, %arg2: i32) -> (i32, i32) {
    %c0_i32 = arith.constant 0 : i32
    return %arg0, %arg1 : i32, i32
  }
}

</mosaic_0001>

<llo_original>
// kernel: tpu_custom_call.1
$region0: #{tpu_custom_call.1}
  #allocation0 [shape = 'u32[]', space=smem, size = 0x4, offset = 0x4, fixed_abs, tag = 'smem constant byte address 0x4 - core index']
  #allocation1 [shape = 'u32[144,128]{1,0:T(1,128)}', space=vmem, size = 0x12000, scoped, tag = 'internal scratch']
  %s0 = inlined_call_operand.hbm [shape: f32[16,128], index: 0, kind: input, shape index: {}]
  %s1 = inlined_call_operand.hbm [shape: bf16[128,128], index: 1, kind: input, shape index: {}]
  %s2 = inlined_call_operand.vmem [shape: f32[1,128], index: 2, kind: input, shape index: {}]
  %s3 = inlined_call_operand.hbm [shape: f32[16,128], index: 3, kind: output, shape index: {}]
  %s4 = sld [smem:[#allocation0]]
  $region38: #{tpu_custom_call.1} parent=0
    _
  %s6 = ssub.s32 1, %s4
  %s7 = scalar_select 0, %s6, %s4
  $region1: #{tpu_custom_call.1} parent=0
    #allocation2 [shape = 'u8[8192]{0}', space=vmem, size = 0x2000, scoped, tag = 'input window, operand 0, single buffered']
    #allocation3 [shape = 's32[1]{0}', space=sflag, size = 0x4, scoped, tag = 'scoped memory for tpu_custom_call.1']
    #allocation4 [shape = 's32[1]{0}', space=sflag, size = 0x4, scoped, tag = 'scoped memory for tpu_custom_call.1']
    #allocation5 [shape = 'u8[32768]{0}', space=vmem, size = 0x8000, scoped, tag = 'input window, operand 1, single buffered']
    #allocation6 [shape = 's32[1]{0}', space=sflag, size = 0x4, scoped, tag = 'scoped memory for tpu_custom_call.1']
    #allocation7 [shape = 'u8[8192]{0}', space=vmem, size = 0x2000, scoped, tag = 'output window, operand 0, single buffered']
    %8 = vsyncpa [#allocation3], 0
    %9 = vsyncpa [#allocation6], 0
    %10 = vsyncpa [#allocation4], 0
    // Predicated region
    $region2: #{tpu_custom_call.1} parent=1 // pred_check
      _
    $region3: #{tpu_custom_call.1} parent=1 // pred_check_branch
      %12 = sbr.rel (0) target = $region5
    $region4: #{tpu_custom_call.1} parent=1 // pred_region
      %s14 = ssub.s32 256, 256
      %15 = vsyncadd [#allocation3], %s14
      %s16 = sshll.u32 [#allocation2], 4
      %s17 = int_to_ptr.vmem [resolvable:$true] %s16
      %22 = dma.hbm_to_vmem [thread:$0]  %s0, 256, %s17, [#allocation3], 128, 128, 8
    $region5: #{tpu_custom_call.1} parent=1 // pred_fallthru
      _
    // Predicated region
    $region6: #{tpu_custom_call.1} parent=1 // pred_check
      _
    $region7: #{tpu_custom_call.1} parent=1 // pred_check_branch
      %24 = sbr.rel (0) target = $region9
    $region8: #{tpu_custom_call.1} parent=1 // pred_region
      %s26 = ssub.s32 1024, 1024
      %27 = vsyncadd [#allocation6], %s26
      %s28 = sshll.u32 [#allocation5], 4
      %s29 = int_to_ptr.vmem [resolvable:$true] %s28
      %34 = dma.hbm_to_vmem [thread:$0]  %s1, 1024, %s29, [#allocation6], 64, 64, 4
    $region9: #{tpu_custom_call.1} parent=1 // pred_fallthru
      _
    // Predicated region
    $region10: #{tpu_custom_call.1} parent=1 // pred_check
      _
    $region11: #{tpu_custom_call.1} parent=1 // pred_check_branch
      %36 = sbr.rel (0) target = $region13
    $region12: #{tpu_custom_call.1} parent=1 // pred_region
      _
    $region13: #{tpu_custom_call.1} parent=1 // pred_fallthru
      _
    // Predicated region
    $region14: #{tpu_custom_call.1} parent=1 // pred_check
      _
    $region15: #{tpu_custom_call.1} parent=1 // pred_check_branch
      %38 = sbr.rel (0) target = $region17
    $region16: #{tpu_custom_call.1} parent=1 // pred_region
      %39 = dma.done [#allocation3], 256
    $region17: #{tpu_custom_call.1} parent=1 // pred_fallthru
      _
    // Predicated region
    $region18: #{tpu_custom_call.1} parent=1 // pred_check
      _
    $region19: #{tpu_custom_call.1} parent=1 // pred_check_branch
      %41 = sbr.rel (0) target = $region21
    $region20: #{tpu_custom_call.1} parent=1 // pred_region
      %42 = dma.done [#allocation6], 1024
    $region21: #{tpu_custom_call.1} parent=1 // pred_fallthru
      _
    %p44 = scmp.eq.s32.totalorder 0, 0
    // Predicated region
    $region22: #{tpu_custom_call.1} parent=1 // pred_check
      %p45 = pneg %p44
    $region23: #{tpu_custom_call.1} parent=1 // pred_check_branch
      %47 = sbr.rel (%p45) target = $region25
    $region24: #{tpu_custom_call.1} parent=1 // pred_region
      %48 = vst [vmem:[#allocation7] sm:$0xff] 0.0
      %49 = vst [vmem:[#allocation7 + $0x8] sm:$0xff] 0.0
    $region25: #{tpu_custom_call.1} parent=1 // pred_fallthru
      _
    %v50 = vld [vmem:[#allocation7] sm:$0xff]
    %v51 = vld [vmem:[#allocation7 + $0x8] sm:$0xff]
    %v52 = vld [vmem:[#allocation2] sm:$0xff]
    %v53 = vld [vmem:[#allocation2 + $0x8] sm:$0xff]
    %v54 = vpack.c.bf16 %v53, %v52
    %v55 = vld [vmem:[#allocation5] sm:$0xf]
    %v56 = vld [vmem:[#allocation5 + $0x4] sm:$0xf]
    %v57 = vld [vmem:[#allocation5 + $0x8] sm:$0xf]
    %v58 = vld [vmem:[#allocation5 + $0xc] sm:$0xf]
    %v59 = vld [vmem:[#allocation5 + $0x10] sm:$0xf]
    %v60 = vld [vmem:[#allocation5 + $0x14] sm:$0xf]
    %v61 = vld [vmem:[#allocation5 + $0x18] sm:$0xf]
    %v62 = vld [vmem:[#allocation5 + $0x1c] sm:$0xf]
    %v63 = vld [vmem:[#allocation5 + $0x20] sm:$0xf]
    %v64 = vld [vmem:[#allocation5 + $0x24] sm:$0xf]
    %v65 = vld [vmem:[#allocation5 + $0x28] sm:$0xf]
    %v66 = vld [vmem:[#allocation5 + $0x2c] sm:$0xf]
    %v67 = vld [vmem:[#allocation5 + $0x30] sm:$0xf]
    %v68 = vld [vmem:[#allocation5 + $0x34] sm:$0xf]
    %v69 = vld [vmem:[#allocation5 + $0x38] sm:$0xf]
    %v70 = vld [vmem:[#allocation5 + $0x3c] sm:$0xf]
    %v87 = vunpack.c.l.b16 %v55
    %v88 = vunpack.c.l.b16 %v56
    %v89 = vunpack.c.l.b16 %v57
    %v90 = vunpack.c.l.b16 %v58
    %v91 = vunpack.c.l.b16 %v59
    %v92 = vunpack.c.l.b16 %v60
    %v93 = vunpack.c.l.b16 %v61
    %v94 = vunpack.c.l.b16 %v62
    %v95 = vunpack.c.l.b16 %v63
    %v96 = vunpack.c.l.b16 %v64
    %v97 = vunpack.c.l.b16 %v65
    %v98 = vunpack.c.l.b16 %v66
    %v99 = vunpack.c.l.b16 %v67
    %v100 = vunpack.c.l.b16 %v68
    %v101 = vunpack.c.l.b16 %v69
    %v102 = vunpack.c.l.b16 %v70
    %v103 = vpack.c.b16 %v88, %v87
    %v104 = vpack.c.b16 %v90, %v89
    %v105 = vpack.c.b16 %v92, %v91
    %v106 = vpack.c.b16 %v94, %v93
    %v107 = vpack.c.b16 %v96, %v95
    %v108 = vpack.c.b16 %v98, %v97
    %v109 = vpack.c.b16 %v100, %v99
    %v110 = vpack.c.b16 %v102, %v101
    %119 = vmatprep.subr.bf16.mxu0 0
    %120 = vmatpush1.bf16.msra.mxu0 %v103
    %121 = vmatprep.subr.bf16.mxu0 0
    %122 = vmatpush1.bf16.msra.mxu0 %v104
    %123 = vmatprep.subr.bf16.mxu0 0
    %124 = vmatpush1.bf16.msra.mxu0 %v105
    %125 = vmatprep.subr.bf16.mxu0 0
    %126 = vmatpush1.bf16.msra.mxu0 %v106
    %127 = vmatprep.subr.bf16.mxu0 0
    %128 = vmatpush1.bf16.msra.mxu0 %v107
    %129 = vmatprep.subr.bf16.mxu0 0
    %130 = vmatpush1.bf16.msra.mxu0 %v108
    %131 = vmatprep.subr.bf16.mxu0 0
    %132 = vmatpush1.bf16.msra.mxu0 %v109
    %133 = vmatprep.subr.bf16.mxu0 0
    %134 = vmatpush1.bf16.msra.mxu0 %v110
    %135 = vmatprep.subr.bf16.mxu0 0
    %136 = vmatpush1.bf16.msra.mxu0 0
    %137 = vmatprep.subr.bf16.mxu0 0
    %138 = vmatpush1.bf16.msra.mxu0 0
    %139 = vmatprep.subr.bf16.mxu0 0
    %140 = vmatpush1.bf16.msra.mxu0 0
    %141 = vmatprep.subr.bf16.mxu0 0
    %142 = vmatpush1.bf16.msra.mxu0 0
    %143 = vmatprep.subr.bf16.mxu0 0
    %144 = vmatpush1.bf16.msra.mxu0 0
    %145 = vmatprep.subr.bf16.mxu0 0
    %146 = vmatpush1.bf16.msra.mxu0 0
    %147 = vmatprep.subr.bf16.mxu0 0
    %148 = vmatpush1.bf16.msra.mxu0 0
    %149 = vmatprep.subr.bf16.mxu0 0
    %150 = vmatpush1.bf16.msra.mxu0 0
    %151 = vmatprep.mubr.bf16.mxu0 0
    %152 = vmatmul.mubr.bf16.gmra.mrb[0].mxu0 %v54
    %v153 = vpop.f32.mrb[0].mxu0
    %v154 = vadd.f32 0.0, %v153
    %v155 = vpop.f32.mrb[0].mxu0
    %v156 = vpop.f32.mrb[0].mxu0
    %v157 = vadd.f32 0.0, %v156
    %v158 = vpop.f32.mrb[0].mxu0
    %159 = vdwg.mxu0
    %v160 = vadd.f32 %v50, %v154
    %v161 = vadd.f32 %v51, %v157
    %162 = vst [vmem:[#allocation7] sm:$0xff] %v160
    %163 = vst [vmem:[#allocation7 + $0x8] sm:$0xff] %v161
    // Predicated region
    $region26: #{tpu_custom_call.1} parent=1 // pred_check
      %p164 = pneg %p44
    $region27: #{tpu_custom_call.1} parent=1 // pred_check_branch
      %166 = sbr.rel (%p164) target = $region29
    $region28: #{tpu_custom_call.1} parent=1 // pred_region
      %v167 = vld [vmem:[#allocation7] sm:$0xff]
      %v168 = vld [vmem:[#allocation7 + $0x8] sm:$0xff]
      %v169 = vld [vmem:[%s2] sm:$0x1]
      %v171 = vlaneseq
      %v172 = vshrl.u32 %v171, 7
      %v173 = vsub.s32 0, %v172
      %v174 = vrot.slane %v169, %v173
      %v176 = vadd.f32 %v167, %v174
      %v177 = vadd.f32 %v168, %v174
      %v178 = vmul.f32 %v176, 0.1
      %v179 = vmul.f32 %v177, 0.1
      %v180 = vmax.f32 %v176, %v178
      %v181 = vmax.f32 %v177, %v179
      %182 = vst [vmem:[#allocation7] sm:$0xff] %v180
      %183 = vst [vmem:[#allocation7 + $0x8] sm:$0xff] %v181
    $region29: #{tpu_custom_call.1} parent=1 // pred_fallthru
      _
    // Predicated region
    $region30: #{tpu_custom_call.1} parent=1 // pred_check
      _
    $region31: #{tpu_custom_call.1} parent=1 // pred_check_branch
      %185 = sbr.rel (0) target = $region33
    $region32: #{tpu_custom_call.1} parent=1 // pred_region
      %s187 = ssub.s32 256, 256
      %188 = vsyncadd [#allocation4], %s187
      %s189 = sshll.u32 [#allocation7], 4
      %s190 = int_to_ptr.vmem [resolvable:$true] %s189
      %195 = dma.vmem_to_hbm [thread:$0]  %s190, 256, %s3, [#allocation4], 128, 128, 8
    $region33: #{tpu_custom_call.1} parent=1 // pred_fallthru
      _
    // Predicated region
    $region34: #{tpu_custom_call.1} parent=1 // pred_check
      _
    $region35: #{tpu_custom_call.1} parent=1 // pred_check_branch
      %197 = sbr.rel (0) target = $region37
    $region36: #{tpu_custom_call.1} parent=1 // pred_region
      %198 = dma.done [#allocation4], 256
    $region37: #{tpu_custom_call.1} parent=1 // pred_fallthru
      _
    %199 = vsyncpa [#allocation3], 1
    %200 = vsyncpa [#allocation6], 1
    %201 = vsyncpa [#allocation4], 1

</llo_original>
